<compile_context>
chip_gen: v5e
topology: v5e:2x2
jax: 0.10.0
libtpu: 0.0.40
codegen_flags: <defaults>
</compile_context>

<pallas_src>
import functools

import jax
import jax.numpy as jnp
from jax.experimental import pallas as pl
from jax.experimental.pallas import tpu as pltpu


def _indep_attn_kernel(idx_ref, words_ref, tab_ref, affine_ref, out_ref, *, num_attribs):
    """One grid step handles a block of Bb batch elements (batched, no per-b loop).

    idx_ref   : VMEM (1, Bb, A*Vp) int32 -- per-cell attribute ids, attribute-major,
                each attribute plane padded to Vp (multiple of 128) lanes.
    words_ref : VMEM (1, Bb, L, E) f32   -- mission word embeddings.
    tab_ref   : VMEM (E, T)        f32   -- attrib_emb transposed, resident block.
    affine_ref: SMEM (2,)          f32   -- [scale, shift].
    out_ref   : VMEM (1, Bb, Vp)   f32   -- projected cell scores (lane-dense).
    """
    _, Bb, L, E = words_ref.shape
    AVp = idx_ref.shape[2]
    A = num_attribs
    Vp = AVp // A
    T = tab_ref.shape[1]

    scale = affine_ref[0]
    shift = affine_ref[1]

    words = words_ref[0]          # [Bb, L, E]
    idx = idx_ref[0]              # [Bb, A*Vp] int32
    tab_t = tab_ref[...]          # [E, T]

    # (1) Project every mission word against the whole attribute-embedding table:
    #     word_proj[b, l, t] = <words[b,l,:], attrib_emb[t,:]>.
    word_proj = jnp.dot(
        words.reshape(Bb * L, E), tab_t, preferred_element_type=jnp.float32
    ).reshape(Bb, L, T)

    # (2) One-hot selection matrix built on-chip from the int32 indices
    #     (replaces the old XLA pre-gather of a 32x larger f32 tensor).
    t_iota = jax.lax.broadcasted_iota(jnp.int32, (Bb, T, AVp), 1)
    sel = (idx[:, None, :] == t_iota).astype(jnp.float32)        # [Bb, T, A*Vp]

    # (3) logits[b, l, a*Vp+v] = word_proj[b, l, idx[b, a*Vp+v]] as ONE batched
    #     MXU matmul over the whole Bb block.
    logits = jax.lax.dot_general(
        word_proj, sel,
        dimension_numbers=(((2,), (1,)), ((0,), (0,))),
        preferred_element_type=jnp.float32)                       # [Bb, L, A*Vp]

    # (4) Softmax over the attribute axis.  Each plane is a 128-lane-aligned
    #     static lane slice -> pure VPU/EUP, no relayouts.
    planes = [logits[:, :, a * Vp:(a + 1) * Vp] for a in range(A)]
    m = planes[0]
    for a in range(1, A):
        m = jnp.maximum(m, planes[a])
    exps = [jnp.exp(p - m) for p in planes]
    denom = exps[0]
    weighted = exps[0] * planes[0]
    for a in range(1, A):
        denom = denom + exps[a]
        weighted = weighted + exps[a] * planes[a]
    # Approx reciprocal on the EUP + one Newton step (near-exact, VALU stays free).
    r = pl.reciprocal(denom, approx=True)
    r = r * (2.0 - denom * r)
    per_word = weighted * r                                       # [Bb, L, Vp]

    # (5) AND-style combination: product over the L words via a log2 halving tree.
    x = per_word
    rows = L
    while rows > 1 and rows % 2 == 0:
        half = rows // 2
        x = x[:, :half, :] * x[:, half:, :]
        rows = half
    cell = x[:, 0, :]
    for rr in range(1, rows):                                     # only for odd L
        cell = cell * x[:, rr, :]
    # cell: [Bb, Vp]

    out_ref[0] = scale * cell + shift


def _choose_tiling(B, step_bytes_per_b, batch_block):
    """Pick Bb from the per-chip VMEM budget; keep nb >= 2 so v7x uses both TCs."""
    try:
        info = pltpu.get_tpu_info()
        vmem_cap = int(getattr(info, "vmem_capacity_bytes", 64 << 20))
    except Exception:  # pragma: no cover - conservative fallback
        vmem_cap = 64 << 20

    if batch_block is None:
        budget = vmem_cap // 4     # headroom: double-buffered I/O + compiler scratch
        bb = max(1, budget // max(1, step_bytes_per_b))
        bb = int(min(bb, B))
        if bb >= B and B > 1:      # force >= 2 grid steps (v7x has 2 TensorCores)
            bb = -(-B // 2)
    else:
        bb = int(max(1, min(batch_block, B)))

    nb = -(-B // bb)
    need = 3 * bb * step_bytes_per_b + (4 << 20)
    vmem_limit = int(min(int(vmem_cap * 0.9), max(32 << 20, need)))
    return bb, nb, vmem_limit


def independent_attention_projection(images, missions, params, *,
                                     batch_block=None, return_components=True):
    """Forward pass of IndependentAttentionProjection.

    Returns (projected_image_components [B,H,W], image_components [B,H,W,A,E]).
    """
    attrib_emb = params["attrib_emb"]        # [total_attribs, E]
    word_emb = params["word_emb"]            # [n_words, E]
    affine = jnp.asarray(params["affine"], dtype=jnp.float32)   # (2,) [scale, shift]
    attrib_offsets = params["attrib_offsets"]

    B, H, W, A = images.shape
    T, E = attrib_emb.shape
    L = missions.shape[1]
    V = H * W
    Vp = ((V + 127) // 128) * 128            # 128-lane aligned per-attribute plane

    # ---- glue: index arithmetic / tiny embedding lookups (plain JAX) ----
    offsets = jnp.asarray(attrib_offsets[:-1], dtype=images.dtype)
    idx = images + offsets[None, None, None, :]                  # [B,H,W,A]
    # Module contract returns the gathered components; skip via flag if unused.
    image_components = attrib_emb[idx] if return_components else None

    # int32 cell indices, attribute-major, each plane lane-padded to Vp.
    idx_av = jnp.transpose(idx.reshape(B, V, A), (0, 2, 1))      # [B, A, V]
    if Vp != V:
        idx_av = jnp.pad(idx_av, ((0, 0), (0, 0), (0, Vp - V)))  # pad with id 0 (valid)
    idx_av = idx_av.reshape(B, A * Vp)                           # [B, A*Vp] int32

    words = word_emb[missions].astype(jnp.float32)               # [B, L, E] (tiny)
    tab_t = attrib_emb.astype(jnp.float32).T                     # [E, T] resident table

    # ---- batch tiling, VMEM-budgeted ----
    step_bytes_per_b = 4 * (A * Vp            # idx (int32)
                            + L * E           # words
                            + T * A * Vp      # one-hot selection
                            + 3 * L * A * Vp  # logits + exp/weighted temporaries
                            + Vp)             # output row
    Bb, nb, vmem_limit = _choose_tiling(B, step_bytes_per_b, batch_block)
    Bp = nb * Bb
    if Bp != B:
        pad = Bp - B
        idx_av = jnp.pad(idx_av, ((0, pad), (0, 0)))
        words = jnp.pad(words, ((0, pad), (0, 0), (0, 0)))

    idx_blocks = idx_av.reshape(nb, Bb, A * Vp)
    word_blocks = words.reshape(nb, Bb, L, E)

    kernel = functools.partial(_indep_attn_kernel, num_attribs=A)

    # ---- hot path: Pallas kernel ----
    scores = pl.pallas_call(
        kernel,
        out_shape=jax.ShapeDtypeStruct((nb, Bb, Vp), jnp.float32),
        grid_spec=pltpu.PrefetchScalarGridSpec(
            num_scalar_prefetch=0,
            grid=(nb,),
            in_specs=[
                pl.BlockSpec((1, Bb, A * Vp), lambda n: (n, 0, 0)),
                pl.BlockSpec((1, Bb, L, E), lambda n: (n, 0, 0, 0)),
                pl.BlockSpec((E, T), lambda n: (0, 0)),          # VMEM-resident table
                pl.BlockSpec(memory_space=pltpu.MemorySpace.SMEM),
            ],
            out_specs=pl.BlockSpec((1, Bb, Vp), lambda n: (n, 0, 0)),
        ),
        compiler_params=pltpu.CompilerParams(
            dimension_semantics=("parallel",),
            vmem_limit_bytes=vmem_limit,
        ),
    )(idx_blocks, word_blocks, tab_t, affine)

    projected = scores.reshape(Bp, Vp)[:B, :V].reshape(B, H, W)
    return projected, image_components


def _reference(images, missions, params):
    """Pure-JAX reference for correctness checking."""
    attrib_emb = params["attrib_emb"]
    word_emb = params["word_emb"]
    scale, shift = params["affine"][0], params["affine"][1]
    attrib_offsets = params["attrib_offsets"]

    B, H, W, A = images.shape
    V = H * W

    offsets = jnp.asarray(attrib_offsets[:-1], dtype=images.dtype)
    image_components = attrib_emb[images + offsets[None, None, None, :]]
    comps = image_components.reshape(B, V, A, -1).transpose(0, 2, 1, 3)  # [B,A,V,E]
    words = word_emb[missions]                                           # [B,L,E]

    logits = jnp.einsum("bave,ble->balv", comps, words)   # [B,A,L,V]
    att = jax.nn.softmax(logits, axis=1)
    per_word = jnp.sum(att * logits, axis=1)               # [B,L,V]
    cell = jnp.prod(per_word, axis=1)                      # [B,V]
    projected = (scale * cell + shift).reshape(B, H, W)
    return projected, image_components


if __name__ == "__main__":
    # Small shapes consistent with the module's forward.
    B, H, W = 2, 8, 8
    attrib_offsets = [0, 8, 16, 20]          # 3 attribute channels, 20 total ids
    A = len(attrib_offsets) - 1
    emb_dim = 32
    n_words = 16
    L = 8

    key = jax.random.PRNGKey(0)
    k_attrib, k_word, k_img0, k_img1, k_img2, k_mis = jax.random.split(key, 6)

    params = {
        "attrib_emb": 0.1 * jax.random.normal(
            k_attrib, (attrib_offsets[-1], emb_dim), dtype=jnp.float32
        ),
        "word_emb": 0.1 * jax.random.normal(
            k_word, (n_words, emb_dim), dtype=jnp.float32
        ),
        "affine": jnp.array([1.0, 0.0], dtype=jnp.float32),  # [scale, shift]
        "attrib_offsets": attrib_offsets,
    }

    # Attribute images: channel k takes values in [0, size_k).
    sizes = [attrib_offsets[i + 1] - attrib_offsets[i] for i in range(A)]
    channels = [
        jax.random.randint(k, (B, H, W), 0, sizes[i], dtype=jnp.int32)
        for i, k in enumerate([k_img0, k_img1, k_img2])
    ]
    images = jnp.stack(channels, axis=-1)                   # [B,H,W,A] int32
    missions = jax.random.randint(k_mis, (B, L), 0, n_words, dtype=jnp.int32)

    projected, image_components = independent_attention_projection(
        images, missions, params
    )
    jax.block_until_ready((projected, image_components))

    ref_projected, ref_components = _reference(images, missions, params)
    assert projected.shape == (B, H, W)
    assert image_components.shape == (B, H, W, A, emb_dim)
    assert jnp.allclose(projected, ref_projected, rtol=1e-3, atol=1e-4)
    assert jnp.allclose(image_components, ref_components)

    print("KERNEL_OK")
</pallas_src>

<mosaic_0001>
module attributes {stable_mosaic.version = 11 : i64} {
  func.func @_indep_attn_kernel(%arg0: i32, %arg1: memref<1x1x384xi32, #tpu.memory_space<vmem>>, %arg2: memref<1x1x8x32xf32, #tpu.memory_space<vmem>>, %arg3: memref<32x20xf32, #tpu.memory_space<vmem>>, %arg4: memref<2xf32, #tpu.memory_space<smem>>, %arg5: memref<1x1x128xf32, #tpu.memory_space<vmem>>) attributes {dimension_semantics = [#tpu.dimension_semantics<parallel>], iteration_bounds = array<i64: 2>, scalar_prefetch = 0 : i64, scratch_operands = 0 : i64, tpu.core_type = #tpu.core_type<tc>, window_params = [{transform_indices = @transform_0, window_bounds = array<i64: 1, 1, 384>}, {transform_indices = @transform_1, window_bounds = array<i64: 1, 1, 8, 32>}, {pipeline_mode = #tpu.pipeline_mode<synchronous>, transform_indices = @transform_2, window_bounds = array<i64: 32, 20>}, {transform_indices = @transform_3, window_bounds = array<i64: 2>}, {transform_indices = @transform_4, window_bounds = array<i64: 1, 1, 128>}]} {
    %c0 = arith.constant 0 : index
    %0 = memref.load %arg4[%c0] : memref<2xf32, #tpu.memory_space<smem>>
    %c1 = arith.constant 1 : index
    %1 = memref.load %arg4[%c1] : memref<2xf32, #tpu.memory_space<smem>>
    %c0_0 = arith.constant 0 : index
    %c0_1 = arith.constant 0 : index
    %c0_2 = arith.constant 0 : index
    %c0_3 = arith.constant 0 : index
    %2 = vector.load %arg2[%c0_0, %c0_1, %c0_2, %c0_3] : memref<1x1x8x32xf32, #tpu.memory_space<vmem>>, vector<1x1x8x32xf32>
    %3 = vector.shape_cast %2 : vector<1x1x8x32xf32> to vector<1x8x32xf32>
    %c0_4 = arith.constant 0 : index
    %c0_5 = arith.constant 0 : index
    %c0_6 = arith.constant 0 : index
    %4 = vector.load %arg1[%c0_4, %c0_5, %c0_6] : memref<1x1x384xi32, #tpu.memory_space<vmem>>, vector<1x1x384xi32>
    %5 = vector.shape_cast %4 : vector<1x1x384xi32> to vector<1x384xi32>
    %c0_7 = arith.constant 0 : index
    %c0_8 = arith.constant 0 : index
    %6 = vector.load %arg3[%c0_7, %c0_8] : memref<32x20xf32, #tpu.memory_space<vmem>>, vector<32x20xf32>
    %7 = vector.shape_cast %3 : vector<1x8x32xf32> to vector<8x32xf32>
    %cst = arith.constant dense<0.000000e+00> : vector<8x20xf32>
    %8 = tpu.matmul %7, %6, %cst {dimension_numbers = #tpu.dot_dimension_numbers<[1], [0], [0], [1], [0, 0, 1, 1], [], []>} : vector<8x32xf32>, vector<32x20xf32>, vector<8x20xf32> -> vector<8x20xf32>
    %9 = vector.shape_cast %8 : vector<8x20xf32> to vector<1x8x20xf32>
    %10 = tpu.iota {dimensions = array<i32: 1>} : vector<1x20x384xi32>
    %11 = vector.shape_cast %5 : vector<1x384xi32> to vector<1x1x384xi32>
    %12 = vector.broadcast %11 : vector<1x1x384xi32> to vector<1x20x384xi32>
    %13 = arith.cmpi eq, %12, %10 : vector<1x20x384xi32>
    %14 = arith.extui %13 : vector<1x20x384xi1> to vector<1x20x384xi32>
    %15 = arith.sitofp %14 : vector<1x20x384xi32> to vector<1x20x384xf32>
    %cst_9 = arith.constant dense<0.000000e+00> : vector<1x8x384xf32>
    %16 = tpu.matmul %9, %15, %cst_9 {dimension_numbers = #tpu.dot_dimension_numbers<[2], [1], [1], [2], [0, 0, 0, 1, 1, 2], [0], [0]>} : vector<1x8x20xf32>, vector<1x20x384xf32>, vector<1x8x384xf32> -> vector<1x8x384xf32>
    %17 = vector.extract_strided_slice %16 {offsets = [0, 0, 0], sizes = [1, 8, 128], strides = [1, 1, 1]} : vector<1x8x384xf32> to vector<1x8x128xf32>
    %18 = vector.extract_strided_slice %16 {offsets = [0, 0, 128], sizes = [1, 8, 128], strides = [1, 1, 1]} : vector<1x8x384xf32> to vector<1x8x128xf32>
    %19 = vector.extract_strided_slice %16 {offsets = [0, 0, 256], sizes = [1, 8, 128], strides = [1, 1, 1]} : vector<1x8x384xf32> to vector<1x8x128xf32>
    %20 = arith.maximumf %17, %18 : vector<1x8x128xf32>
    %21 = arith.maximumf %20, %19 : vector<1x8x128xf32>
    %22 = arith.subf %17, %21 : vector<1x8x128xf32>
    %23 = math.exp %22 : vector<1x8x128xf32>
    %24 = arith.subf %18, %21 : vector<1x8x128xf32>
    %25 = math.exp %24 : vector<1x8x128xf32>
    %26 = arith.subf %19, %21 : vector<1x8x128xf32>
    %27 = math.exp %26 : vector<1x8x128xf32>
    %28 = arith.mulf %23, %17 : vector<1x8x128xf32>
    %29 = arith.addf %23, %25 : vector<1x8x128xf32>
    %30 = arith.mulf %25, %18 : vector<1x8x128xf32>
    %31 = arith.addf %28, %30 : vector<1x8x128xf32>
    %32 = arith.addf %29, %27 : vector<1x8x128xf32>
    %33 = arith.mulf %27, %19 : vector<1x8x128xf32>
    %34 = arith.addf %31, %33 : vector<1x8x128xf32>
    %35 = tpu.reciprocal %32 {approx = true} : vector<1x8x128xf32> -> vector<1x8x128xf32>
    %36 = arith.mulf %32, %35 : vector<1x8x128xf32>
    %cst_10 = arith.constant 2.000000e+00 : f32
    %37 = vector.broadcast %cst_10 : f32 to vector<1x8x128xf32>
    %38 = arith.subf %37, %36 : vector<1x8x128xf32>
    %39 = arith.mulf %35, %38 : vector<1x8x128xf32>
    %40 = arith.mulf %34, %39 : vector<1x8x128xf32>
    %41 = vector.extract_strided_slice %40 {offsets = [0, 0, 0], sizes = [1, 4, 128], strides = [1, 1, 1]} : vector<1x8x128xf32> to vector<1x4x128xf32>
    %42 = vector.extract_strided_slice %40 {offsets = [0, 4, 0], sizes = [1, 4, 128], strides = [1, 1, 1]} : vector<1x8x128xf32> to vector<1x4x128xf32>
    %43 = arith.mulf %41, %42 : vector<1x4x128xf32>
    %44 = vector.extract_strided_slice %43 {offsets = [0, 0, 0], sizes = [1, 2, 128], strides = [1, 1, 1]} : vector<1x4x128xf32> to vector<1x2x128xf32>
    %45 = vector.extract_strided_slice %43 {offsets = [0, 2, 0], sizes = [1, 2, 128], strides = [1, 1, 1]} : vector<1x4x128xf32> to vector<1x2x128xf32>
    %46 = arith.mulf %44, %45 : vector<1x2x128xf32>
    %47 = vector.extract_strided_slice %46 {offsets = [0, 0, 0], sizes = [1, 1, 128], strides = [1, 1, 1]} : vector<1x2x128xf32> to vector<1x1x128xf32>
    %48 = vector.extract_strided_slice %46 {offsets = [0, 1, 0], sizes = [1, 1, 128], strides = [1, 1, 1]} : vector<1x2x128xf32> to vector<1x1x128xf32>
    %49 = arith.mulf %47, %48 : vector<1x1x128xf32>
    %50 = vector.shape_cast %49 : vector<1x1x128xf32> to vector<1x128xf32>
    %51 = vector.broadcast %0 : f32 to vector<1x128xf32>
    %52 = arith.mulf %51, %50 : vector<1x128xf32>
    %53 = vector.broadcast %1 : f32 to vector<1x128xf32>
    %54 = arith.addf %52, %53 : vector<1x128xf32>
    %c0_11 = arith.constant 0 : index
    %c0_12 = arith.constant 0 : index
    %c0_13 = arith.constant 0 : index
    %55 = vector.load %arg5[%c0_11, %c0_12, %c0_13] : memref<1x1x128xf32, #tpu.memory_space<vmem>>, vector<1x1x128xf32>
    %56 = vector.shape_cast %55 : vector<1x1x128xf32> to vector<1x128xf32>
    %57 = vector.shape_cast %54 : vector<1x128xf32> to vector<1x1x128xf32>
    tpu.vector_store %arg5[%c0_11, %c0_12, %c0_13], %57 {strides = array<i32>} : memref<1x1x128xf32, #tpu.memory_space<vmem>>, vector<1x1x128xf32>,
    return
  }
  func.func @transform_0(%arg0: i32) -> (i32, i32, i32) {
    %c0_i32 = arith.constant 0 : i32
    %c0_i32_0 = arith.constant 0 : i32
    %c0_i32_1 = arith.constant 0 : i32
    return %arg0, %c0_i32, %c0_i32_0 : i32, i32, i32
  }
  func.func @transform_1(%arg0: i32) -> (i32, i32, i32, i32) {
    %c0_i32 = arith.constant 0 : i32
    %c0_i32_0 = arith.constant 0 : i32
    %c0_i32_1 = arith.constant 0 : i32
    %c0_i32_2 = arith.constant 0 : i32
    return %arg0, %c0_i32, %c0_i32_0, %c0_i32_1 : i32, i32, i32, i32
  }
  func.func @transform_2(%arg0: i32) -> (i32, i32) {
    %c0_i32 = arith.constant 0 : i32
    %c0_i32_0 = arith.constant 0 : i32
    %c0_i32_1 = arith.constant 0 : i32
    return %c0_i32, %c0_i32_0 : i32, i32
  }
  func.func @transform_3(%arg0: i32) -> i32 {
    %c0_i32 = arith.constant 0 : i32
    %c0_i32_0 = arith.constant 0 : i32
    return %c0_i32 : i32
  }
  func.func @transform_4(%arg0: i32) -> (i32, i32, i32) {
    %c0_i32 = arith.constant 0 : i32
    %c0_i32_0 = arith.constant 0 : i32
    %c0_i32_1 = arith.constant 0 : i32
    return %arg0, %c0_i32, %c0_i32_0 : i32, i32, i32
  }
}

</mosaic_0001>

<llo_original>
// kernel: tpu_custom_call.1
$region0: #{tpu_custom_call.1}
  #allocation0 [shape = 'u32[]', space=smem, size = 0x4, offset = 0x4, fixed_abs, tag = 'smem constant byte address 0x4 - core index']
  #allocation1 [shape = 'u32[72,128]{1,0:T(1,128)}', space=vmem, size = 0x9000, scoped, tag = 'internal scratch']
  %s0 = inlined_call_operand.vmem [shape: s32[2,1,384], index: 0, kind: input, shape index: {}]
  %s1 = inlined_call_operand.vmem [shape: f32[2,1,8,32], index: 1, kind: input, shape index: {}]
  %s2 = inlined_call_operand.vmem [shape: f32[32,20], index: 2, kind: input, shape index: {}]
  %s3 = inlined_call_operand.vmem [shape: f32[2], index: 3, kind: input, shape index: {}]
  %s4 = inlined_call_operand.hbm [shape: f32[2,1,128], index: 4, kind: output, shape index: {}]
  %s5 = sld [smem:[#allocation0]]
  $region53: #{tpu_custom_call.1} parent=0
    _
  %s7 = ssub.s32 1, %s5
  %s8 = scalar_select 0, %s7, %s5
  $region1: #{tpu_custom_call.1} parent=0
    #allocation2 [shape = 'u8[512]{0}', space=smem, size = 0x200, scoped, tag = 'input window, operand 3, single buffered']
    #allocation3 [shape = 's32[2]{0}', space=sflag, size = 0x8, scoped, tag = 'scoped memory for tpu_custom_call.1']
    #allocation4 [shape = 's32[2]{0}', space=sflag, size = 0x8, scoped, tag = 'scoped memory for tpu_custom_call.1']
    #allocation5 [shape = 'u8[1024]{0}', space=vmem, size = 0x400, scoped, tag = 'output window, operand 0']
    %9 = vsyncpa [#allocation4], 0
    %10 = vsyncpa [#allocation3], 0
    %s11 = scalar_lea.sflag [#allocation3], 1
    %12 = vsyncpa %s11, 0
    loop: start=0, step=1, limit=4
    $region2: #{tpu_custom_call.1} parent=1 // loop_pre_header
      _
    $region3: #{tpu_custom_call.1} parent=1 // loop_header
      %s14 = sphi 0, %s18
      %p15 = scmp.ge.s32.totalorder %s14, 4
      %s24 = sphi 0, %s26
      %s27 = sphi 0, %s24
      %s28 = sphi 0, %s27
      %s44 = sphi 0, %s28
      %s50 = sphi 0, %s52
      %s53 = sphi 0, %s50
      %s54 = sphi 0, %s53
      %s70 = sphi 0, %s54
      %s74 = sphi 0, %s74
      %s76 = sphi 0, %s74
      %s77 = sphi 0, %s76
      %s91 = sphi 0, %s77
      %s95 = sphi 0, %s95
      %s97 = sphi 0, %s95
      %s98 = sphi 0, %s97
      %s112 = sphi 0, %s98
      %s118 = sphi 0, %s120
      %s121 = sphi 0, %s118
      %s122 = sphi 0, %s121
      %s138 = sphi 0, %s122
    $region4: #{tpu_custom_call.1} parent=1 // loop_header_branch
      %17 = sbr.rel (%p15) target = $region8
    $region5: #{tpu_custom_call.1} parent=1 // loop_body
      %s19 = ssub.s32 %s14, 1
      %s20 = ssub.s32 %s14, 2
      %s21 = sadd.s32 %s14, 1
      %s22 = ssub.s32 %s14, %s21
      %p23 = scmp.eq.s32.totalorder %s22, 0
      %s25 = sadd.s32 %s24, 1
      %s26 = scalar_select %p23, %s24, %s25
      %p29 = pneg %p23
      %p30 = scmp.eq.s32.totalorder %s14, 1
      %p31 = por %p29, %p30
      %p32 = scmp.ne.s32.totalorder %s24, %s27
      %p33 = scmp.eq.s32.totalorder %s14, 0
      %p34 = por %p32, %p33
      %p35 = scmp.ne.s32.totalorder %s24, %s27
      %p36 = scmp.eq.s32.totalorder %s19, 1
      %p37 = por %p35, %p36
      %p38 = scmp.ne.s32.totalorder %s27, %s28
      %p39 = scmp.eq.s32.totalorder %s19, 0
      %p40 = por %p38, %p39
      %p41 = scmp.ne.s32.totalorder %s27, %s28
      %p42 = scmp.eq.s32.totalorder %s20, 1
      %p43 = por %p41, %p42
      %p45 = scmp.ne.s32.totalorder %s28, %s44
      %p46 = scmp.eq.s32.totalorder %s20, 0
      %p47 = por %p45, %p46
      %s48 = ssub.s32 %s14, %s21
      %p49 = scmp.eq.s32.totalorder %s48, 0
      %s51 = sadd.s32 %s50, 1
      %s52 = scalar_select %p49, %s50, %s51
      %p55 = pneg %p49
      %p56 = scmp.eq.s32.totalorder %s14, 1
      %p57 = por %p55, %p56
      %p58 = scmp.ne.s32.totalorder %s50, %s53
      %p59 = scmp.eq.s32.totalorder %s14, 0
      %p60 = por %p58, %p59
      %p61 = scmp.ne.s32.totalorder %s50, %s53
      %p62 = scmp.eq.s32.totalorder %s19, 1
      %p63 = por %p61, %p62
      %p64 = scmp.ne.s32.totalorder %s53, %s54
      %p65 = scmp.eq.s32.totalorder %s19, 0
      %p66 = por %p64, %p65
      %p67 = scmp.ne.s32.totalorder %s53, %s54
      %p68 = scmp.eq.s32.totalorder %s20, 1
      %p69 = por %p67, %p68
      %p71 = scmp.ne.s32.totalorder %s54, %s70
      %p72 = scmp.eq.s32.totalorder %s20, 0
      %p73 = por %p71, %p72
      %s75 = sadd.s32 %s74, 1
      %p78 = scmp.eq.s32.totalorder %s14, 1
      %p79 = scmp.ne.s32.totalorder %s74, %s76
      %p80 = scmp.eq.s32.totalorder %s14, 0
      %p81 = por %p79, %p80
      %p82 = scmp.ne.s32.totalorder %s74, %s76
      %p83 = scmp.eq.s32.totalorder %s19, 1
      %p84 = por %p82, %p83
      %p85 = scmp.ne.s32.totalorder %s76, %s77
      %p86 = scmp.eq.s32.totalorder %s19, 0
      %p87 = por %p85, %p86
      %p88 = scmp.ne.s32.totalorder %s76, %s77
      %p89 = scmp.eq.s32.totalorder %s20, 1
      %p90 = por %p88, %p89
      %p92 = scmp.ne.s32.totalorder %s77, %s91
      %p93 = scmp.eq.s32.totalorder %s20, 0
      %p94 = por %p92, %p93
      %s96 = sadd.s32 %s95, 1
      %p99 = scmp.eq.s32.totalorder %s14, 1
      %p100 = scmp.ne.s32.totalorder %s95, %s97
      %p101 = scmp.eq.s32.totalorder %s14, 0
      %p102 = por %p100, %p101
      %p103 = scmp.ne.s32.totalorder %s95, %s97
      %p104 = scmp.eq.s32.totalorder %s19, 1
      %p105 = por %p103, %p104
      %p106 = scmp.ne.s32.totalorder %s97, %s98
      %p107 = scmp.eq.s32.totalorder %s19, 0
      %p108 = por %p106, %p107
      %p109 = scmp.ne.s32.totalorder %s97, %s98
      %p110 = scmp.eq.s32.totalorder %s20, 1
      %p111 = por %p109, %p110
      %p113 = scmp.ne.s32.totalorder %s98, %s112
      %p114 = scmp.eq.s32.totalorder %s20, 0
      %p115 = por %p113, %p114
      %s116 = ssub.s32 %s14, %s21
      %p117 = scmp.eq.s32.totalorder %s116, 0
      %s119 = sadd.s32 %s118, 1
      %s120 = scalar_select %p117, %s118, %s119
      %p123 = pneg %p117
      %p124 = scmp.eq.s32.totalorder %s14, 1
      %p125 = por %p123, %p124
      %p126 = scmp.ne.s32.totalorder %s118, %s121
      %p127 = scmp.eq.s32.totalorder %s14, 0
      %p128 = por %p126, %p127
      %p129 = scmp.ne.s32.totalorder %s118, %s121
      %p130 = scmp.eq.s32.totalorder %s19, 1
      %p131 = por %p129, %p130
      %p132 = scmp.ne.s32.totalorder %s121, %s122
      %p133 = scmp.eq.s32.totalorder %s19, 0
      %p134 = por %p132, %p133
      %p135 = scmp.ne.s32.totalorder %s121, %s122
      %p136 = scmp.eq.s32.totalorder %s20, 1
      %p137 = por %p135, %p136
      %p139 = scmp.ne.s32.totalorder %s122, %s138
      %p140 = scmp.eq.s32.totalorder %s20, 0
      %p141 = por %p139, %p140
      %p142 = scmp.le.s32.totalorder 1, %s14
      %p143 = scmp.lt.s32.totalorder %s14, 3
      %p144 = pnand %p142, %p143
      %p145 = pneg %p144
      // Predicated region
      $region9: #{tpu_custom_call.1} parent=5 // pred_check
        _
      $region10: #{tpu_custom_call.1} parent=5 // pred_check_branch
        %147 = sbr.rel (%p144) target = $region12
      $region11: #{tpu_custom_call.1} parent=5 // pred_region
        %s148 = ssub.s32 %s14, 1
        // Predicated region
        $region13: #{tpu_custom_call.1} parent=11 // pred_check
          %p149 = pneg %p87
        $region14: #{tpu_custom_call.1} parent=11 // pred_check_branch
          %151 = sbr.rel (%p149) target = $region16
        $region15: #{tpu_custom_call.1} parent=11 // pred_region
          _
        $region16: #{tpu_custom_call.1} parent=11 // pred_fallthru
          _
        // Predicated region
        $region17: #{tpu_custom_call.1} parent=11 // pred_check
          %p152 = pneg %p108
        $region18: #{tpu_custom_call.1} parent=11 // pred_check_branch
          %154 = sbr.rel (%p152) target = $region20
        $region19: #{tpu_custom_call.1} parent=11 // pred_region
          %156 = vsyncadd [#allocation4], 0
          %s158 = sshll.u32 %s3, 4
          %s159 = int_to_ptr.vmem [resolvable:$true] %s158
          %161 = dma.vmem_to_smem %s159, 16, [#allocation2], [#allocation4]
        $region20: #{tpu_custom_call.1} parent=11 // pred_fallthru
          _
      $region12: #{tpu_custom_call.1} parent=5 // pred_fallthru
        _
      %p162 = scmp.lt.s32.totalorder %s14, 2
      // Predicated region
      $region21: #{tpu_custom_call.1} parent=5 // pred_check
        %p163 = pneg %p162
      $region22: #{tpu_custom_call.1} parent=5 // pred_check_branch
        %165 = sbr.rel (%p163) target = $region24
      $region23: #{tpu_custom_call.1} parent=5 // pred_region
        // Predicated region
        $region25: #{tpu_custom_call.1} parent=23 // pred_check
          %p166 = pneg %p34
        $region26: #{tpu_custom_call.1} parent=23 // pred_check_branch
          %168 = sbr.rel (%p166) target = $region28
        $region27: #{tpu_custom_call.1} parent=23 // pred_region
          %p169 = scmp.lt.s32.totalorder %s14, 1
          %s170 = scalar_select %p169, %s14, 1
          %s171 = smul.addr %s170, 3
          %s172 = scalar_lea.vmem %s0, %s171
        $region28: #{tpu_custom_call.1} parent=23 // pred_fallthru
          _
        // Predicated region
        $region29: #{tpu_custom_call.1} parent=23 // pred_check
          %p173 = pneg %p60
        $region30: #{tpu_custom_call.1} parent=23 // pred_check_branch
          %175 = sbr.rel (%p173) target = $region32
        $region31: #{tpu_custom_call.1} parent=23 // pred_region
          %p176 = scmp.lt.s32.totalorder %s14, 1
          %s177 = scalar_select %p176, %s14, 1
          %s178 = smul.addr %s177, 8
          %s179 = scalar_lea.vmem %s1, %s178
        $region32: #{tpu_custom_call.1} parent=23 // pred_fallthru
          _
      $region24: #{tpu_custom_call.1} parent=5 // pred_fallthru
        _
      %p180 = scmp.le.s32.totalorder 1, %s14
      %p181 = scmp.lt.s32.totalorder %s14, 3
      %p182 = pnand %p180, %p181
      %p183 = pneg %p182
      // Predicated region
      $region33: #{tpu_custom_call.1} parent=5 // pred_check
        _
      $region34: #{tpu_custom_call.1} parent=5 // pred_check_branch
        %185 = sbr.rel (%p182) target = $region36
      $region35: #{tpu_custom_call.1} parent=5 // pred_region
        %s186 = ssub.s32 %s14, 1
        // Predicated region
        $region37: #{tpu_custom_call.1} parent=35 // pred_check
          %p187 = pneg %p108
        $region38: #{tpu_custom_call.1} parent=35 // pred_check_branch
          %189 = sbr.rel (%p187) target = $region40
        $region39: #{tpu_custom_call.1} parent=35 // pred_region
          %191 = dma.done [#allocation4], 16
        $region40: #{tpu_custom_call.1} parent=35 // pred_fallthru
          _
        %192 = sfence
        %p193 = scmp.lt.s32.totalorder %s19, 1
        %s194 = scalar_select %p193, %s19, 1
        %s195 = smul.addr %s194, 3
        %s196 = scalar_lea.vmem %s0, %s195
        %p197 = pneg %p40
        %p198 = pneg %p37
        %p199 = scmp.lt.s32.totalorder %s19, 1
        %s200 = scalar_select %p199, %s19, 1
        %s201 = smul.addr %s200, 8
        %s202 = scalar_lea.vmem %s1, %s201
        %p203 = pneg %p66
        %p204 = pneg %p63
        %p205 = pneg %p87
        %p206 = pneg %p84
        %p207 = pneg %p108
        %p208 = pneg %p105
        %p209 = pneg %p134
        %p210 = pneg %p131
        %s211 = sand.u32 %s121, 1
        %s212 = scalar_lea.sflag [#allocation3], %s211
        %s213 = sand.u32 %s121, 1
        %s214 = scalar_lea.vmem [#allocation5], %s213
        %p215 = scmp.lt.s32.totalorder %s19, 1
        %s216 = scalar_select %p215, %s19, 1
        %s217 = smul.addr %s216, 3
        %s218 = scalar_lea.vmem %s0, %s217
        %p219 = scmp.lt.s32.totalorder %s19, 1
        %s220 = scalar_select %p219, %s19, 1
        %s221 = smul.addr %s220, 8
        %s222 = scalar_lea.vmem %s1, %s221
        %s223 = sld [smem:[#allocation2]]
        %s224 = sld [smem:[#allocation2 + $0x1]]
        %v225 = vld [vmem:[%s222] sm:$0xff]
        %v226 = vld [vmem:[%s218] sm:$0x7]
        %v227 = vld [vmem:[%s2] sm:$0xff]
        %v228 = vld [vmem:[%s2 + $0x8] sm:$0xff]
        %v229 = vld [vmem:[%s2 + $0x10] sm:$0xff]
        %v230 = vld [vmem:[%s2 + $0x18] sm:$0xff]
        %vm231 = vcmask 261120
        %v233 = vsel %vm231, %v225, 0
        %235 = vmatpush.msra.mxu0 0.0
        %236 = vmatpush.msra.mxu0 0.0
        %237 = vmatpush.msra.mxu0 0.0
        %238 = vmatpush.msra.mxu0 0.0
        %239 = vmatpush.msra.mxu0 0.0
        %240 = vmatpush.msra.mxu0 0.0
        %241 = vmatpush.msra.mxu0 0.0
        %242 = vmatpush.msra.mxu0 0.0
        %243 = vmatpush.msra.mxu0 0.0
        %244 = vmatpush.msra.mxu0 0.0
        %245 = vmatpush.msra.mxu0 0.0
        %246 = vmatpush.msra.mxu0 0.0
        %247 = vmatpush.msra.mxu0 %v230
        %248 = vmatpush.msra.mxu0 %v229
        %249 = vmatpush.msra.mxu0 %v228
        %250 = vmatpush.msra.mxu0 %v227
        %251 = vmatmul.f32.gmra.mxu0 %v233
        %v252 = vpop.f32.mrf.mxu0
        %v253 = vadd.f32 0.0, %v252
        %254 = vdwg.mxu0
        %v255 = vlaneseq
        %v256 = vshrl.u32 %v255, 7
        %v257 = vadd.s32 %v256, 8
        %v258 = vadd.s32 %v256, 16
        %v259 = vperm.slane %v226, 0
        %v260 = vperm.slane %v226, 1
        %v261 = vperm.slane %v226, 2
        %vm262 = vcmp.eq.s32.totalorder %v259, %v256
        %vm263 = vcmp.eq.s32.totalorder %v260, %v256
        %vm264 = vcmp.eq.s32.totalorder %v261, %v256
        %vm265 = vcmp.eq.s32.totalorder %v259, %v257
        %vm266 = vcmp.eq.s32.totalorder %v260, %v257
        %vm267 = vcmp.eq.s32.totalorder %v261, %v257
        %vm268 = vcmp.eq.s32.totalorder %v259, %v258
        %vm269 = vcmp.eq.s32.totalorder %v260, %v258
        %vm270 = vcmp.eq.s32.totalorder %v261, %v258
        %v271 = vsel %vm262, 1, 0
        %v272 = vsel %vm263, 1, 0
        %v273 = vsel %vm264, 1, 0
        %v274 = vsel %vm265, 1, 0
        %v275 = vsel %vm266, 1, 0
        %v276 = vsel %vm267, 1, 0
        %v277 = vsel %vm268, 1, 0
        %v278 = vsel %vm269, 1, 0
        %v279 = vsel %vm270, 1, 0
        %v280 = vcvt.s32.f32 %v271
        %v281 = vcvt.s32.f32 %v272
        %v282 = vcvt.s32.f32 %v273
        %v283 = vcvt.s32.f32 %v274
        %v284 = vcvt.s32.f32 %v275
        %v285 = vcvt.s32.f32 %v276
        %v286 = vcvt.s32.f32 %v277
        %v287 = vcvt.s32.f32 %v278
        %v288 = vcvt.s32.f32 %v279
        %vm289 = vcmask 162816
        %v291 = vsel %vm289, %v253, 0
        %vm293 = vcmask 1043456
        %v295 = vsel %vm293, %v286, 0
        %v298 = vsel %vm293, %v287, 0
        %v301 = vsel %vm293, %v288, 0
        %303 = vmatpush.msra.mxu0 0.0
        %304 = vmatpush.msra.mxu0 0.0
        %305 = vmatpush.msra.mxu0 0.0
        %306 = vmatpush.msra.mxu0 0.0
        %307 = vmatpush.msra.mxu0 0.0
        %308 = vmatpush.msra.mxu0 0.0
        %309 = vmatpush.msra.mxu0 0.0
        %310 = vmatpush.msra.mxu0 0.0
        %311 = vmatpush.msra.mxu0 0.0
        %312 = vmatpush.msra.mxu0 0.0
        %313 = vmatpush.msra.mxu0 0.0
        %314 = vmatpush.msra.mxu0 0.0
        %315 = vmatpush.msra.mxu0 0.0
        %316 = vmatpush.msra.mxu0 %v295
        %317 = vmatpush.msra.mxu0 %v283
        %318 = vmatpush.msra.mxu0 %v280
        %319 = vmatmul.f32.gmra.mxu0 %v291
        %v320 = vpop.f32.mrf.mxu0
        %v321 = vadd.f32 0.0, %v320
        %322 = vdwg.mxu0
        %323 = vmatpush.msra.mxu0 0.0
        %324 = vmatpush.msra.mxu0 0.0
        %325 = vmatpush.msra.mxu0 0.0
        %326 = vmatpush.msra.mxu0 0.0
        %327 = vmatpush.msra.mxu0 0.0
        %328 = vmatpush.msra.mxu0 0.0
        %329 = vmatpush.msra.mxu0 0.0
        %330 = vmatpush.msra.mxu0 0.0
        %331 = vmatpush.msra.mxu0 0.0
        %332 = vmatpush.msra.mxu0 0.0
        %333 = vmatpush.msra.mxu0 0.0
        %334 = vmatpush.msra.mxu0 0.0
        %335 = vmatpush.msra.mxu0 0.0
        %336 = vmatpush.msra.mxu0 %v298
        %337 = vmatpush.msra.mxu0 %v284
        %338 = vmatpush.msra.mxu0 %v281
        %339 = vmatmul.f32.gmra.mxu0 %v291
        %v340 = vpop.f32.mrf.mxu0
        %v341 = vadd.f32 0.0, %v340
        %342 = vdwg.mxu0
        %343 = vmatpush.msra.mxu0 0.0
        %344 = vmatpush.msra.mxu0 0.0
        %345 = vmatpush.msra.mxu0 0.0
        %346 = vmatpush.msra.mxu0 0.0
        %347 = vmatpush.msra.mxu0 0.0
        %348 = vmatpush.msra.mxu0 0.0
        %349 = vmatpush.msra.mxu0 0.0
        %350 = vmatpush.msra.mxu0 0.0
        %351 = vmatpush.msra.mxu0 0.0
        %352 = vmatpush.msra.mxu0 0.0
        %353 = vmatpush.msra.mxu0 0.0
        %354 = vmatpush.msra.mxu0 0.0
        %355 = vmatpush.msra.mxu0 0.0
        %356 = vmatpush.msra.mxu0 %v301
        %357 = vmatpush.msra.mxu0 %v285
        %358 = vmatpush.msra.mxu0 %v282
        %359 = vmatmul.f32.gmra.mxu0 %v291
        %v360 = vpop.f32.mrf.mxu0
        %v361 = vadd.f32 0.0, %v360
        %362 = vdwg.mxu0
        %v363 = vmax.f32 %v321, %v341
        %v364 = vmax.f32 %v363, %v361
        %v365 = vsub.f32 %v321, %v364
        %v366 = vmul.f32 %v365, 1.442695
        %v367 = vpow.pop %v366
        %v368 = vsub.f32 %v341, %v364
        %v369 = vmul.f32 %v368, 1.442695
        %v370 = vpow.pop %v369
        %v371 = vsub.f32 %v361, %v364
        %v372 = vmul.f32 %v371, 1.442695
        %v373 = vpow.pop %v372
        %v374 = vmul.f32 %v367, %v321
        %v375 = vadd.f32 %v367, %v370
        %v376 = vmul.f32 %v370, %v341
        %v377 = vadd.f32 %v374, %v376
        %v378 = vadd.f32 %v375, %v373
        %v379 = vmul.f32 %v373, %v361
        %v380 = vadd.f32 %v377, %v379
        %v381 = vrcp.pop %v378
        %v382 = vmul.f32 %v378, %v381
        %v383 = vsub.f32 2.0, %v382
        %v384 = vmul.f32 %v381, %v383
        %v385 = vmul.f32 %v380, %v384
        %v387 = vrot.slane %v385, 4
        %v389 = vmul.f32 %v385, %v387
        %v391 = vrot.slane %v389, 2
        %v393 = vmul.f32 %v389, %v391
        %v395 = vrot.slane %v393, 1
        %v397 = vmul.f32 %v393, %v395
        %v398 = vstv %s223
        %v399 = vmul.f32 %v398, %v397
        %v400 = vstv %s224
        %v401 = vadd.f32 %v399, %v400
        %402 = vst [vmem:[%s214] sm:$0x1] %v401
        %s403 = sand.u32 %s121, 1
        %s404 = scalar_lea.sflag [#allocation3], %s403
        %s405 = sand.u32 %s121, 1
        %s406 = scalar_lea.vmem [#allocation5], %s405
        // Predicated region
        $region41: #{tpu_custom_call.1} parent=35 // pred_check
          %p407 = pneg %p131
        $region42: #{tpu_custom_call.1} parent=35 // pred_check_branch
          %409 = sbr.rel (%p407) target = $region44
        $region43: #{tpu_custom_call.1} parent=35 // pred_region
          %411 = vsyncadd %s404, 0
          %s412 = scalar_lea.hbm %s4, %s19
          %s414 = sshll.u32 %s406, 4
          %s415 = int_to_ptr.vmem [resolvable:$true] %s414
          %s416 = sshll.u32 %s412, 4
          %s417 = int_to_ptr.hbm [resolvable:$true] %s416
          %419 = dma.vmem_to_hbm [thread:$0]  %s415, 16, %s417, %s404
        $region44: #{tpu_custom_call.1} parent=35 // pred_fallthru
          _
      $region36: #{tpu_custom_call.1} parent=5 // pred_fallthru
        _
      %p420 = scmp.le.s32.totalorder 2, %s14
      // Predicated region
      $region45: #{tpu_custom_call.1} parent=5 // pred_check
        %p421 = pneg %p420
      $region46: #{tpu_custom_call.1} parent=5 // pred_check_branch
        %423 = sbr.rel (%p421) target = $region48
      $region47: #{tpu_custom_call.1} parent=5 // pred_region
        %s424 = ssub.s32 %s14, 2
        // Predicated region
        $region49: #{tpu_custom_call.1} parent=47 // pred_check
          %p425 = pneg %p137
        $region50: #{tpu_custom_call.1} parent=47 // pred_check_branch
          %427 = sbr.rel (%p425) target = $region52
        $region51: #{tpu_custom_call.1} parent=47 // pred_region
          %s428 = sand.u32 %s122, 1
          %s429 = scalar_lea.sflag [#allocation3], %s428
          %s430 = sand.u32 %s122, 1
          %s431 = scalar_lea.vmem [#allocation5], %s430
          %433 = dma.done %s429, 16
        $region52: #{tpu_custom_call.1} parent=47 // pred_fallthru
          _
      $region48: #{tpu_custom_call.1} parent=5 // pred_fallthru
        _
    $region6: #{tpu_custom_call.1} parent=1 // loop_footer
      %s18 = sadd.s32 1, %s14
    $region7: #{tpu_custom_call.1} parent=1 // loop_footer_branch
      %13 = sbr.rel target = $region3
    $region8: #{tpu_custom_call.1} parent=1 // loop_exit
      _
    %434 = vsyncpa [#allocation3], 1
    %s435 = scalar_lea.sflag [#allocation3], 1
    %436 = vsyncpa %s435, 1
    %437 = vsyncpa [#allocation4], 1
    %s438 = scalar_lea.sflag [#allocation4], 1
    %439 = vsyncpa %s438, 1

</llo_original>
